<compile_context>
chip_gen: v5e
topology: v5e:2x2
jax: 0.10.0
libtpu: 0.0.40
codegen_flags: <defaults>
</compile_context>

<pallas_src>
import functools

import jax
import jax.numpy as jnp
from jax.experimental import pallas as pl
from jax.experimental.pallas import tpu as pltpu

_LANE = 128


def _layernorm_kernel(x_ref, g_ref, b_ref, o_ref, *, eps):
    """x_ref/o_ref: (Bn, C, L) tile; g_ref/b_ref: (1, C, 1).

    Channels (reduction axis) live in sublanes, flattened spatial in lanes.
    The reduction is per-lane-column, so masked/padded lane tiles stay safe.
    """
    x = x_ref[...].astype(jnp.float32)                  # (Bn, C, L)
    mean = jnp.mean(x, axis=1, keepdims=True)           # (Bn, 1, L)
    xc = x - mean
    var = jnp.mean(xc * xc, axis=1, keepdims=True)      # unbiased=False
    inv = 1.0 / (jnp.sqrt(var) + eps)                   # eps added to *std*
    g = g_ref[...].astype(jnp.float32)                  # (1, C, 1)
    b = b_ref[...].astype(jnp.float32)                  # (1, C, 1)
    o_ref[...] = (xc * inv * g + b).astype(o_ref.dtype)


def _plan_blocks(N, C, HW, itemsize, block_budget):
    """Pick (Bn, l_tile) for block_shape (Bn, C, l_tile).

    Prefers full-spatial contiguous blocks with batch fusion; splits the
    spatial axis (128-multiple tiles, masked last tile) only when a single
    sample's slab exceeds the budget.  Also guarantees >= 2 grid steps when
    the problem allows it (keeps v7x's second TensorCore busy).
    """
    slab_bytes = C * HW * itemsize

    if slab_bytes <= block_budget:
        # Case A: full spatial extent, fuse batch elements.
        l_tile = HW
        bn = max(1, min(N, block_budget // max(1, slab_bytes)))
        while N % bn != 0:
            bn -= 1
    else:
        # Case B: one sample per block, split the spatial axis.
        bn = 1
        if HW < _LANE:
            l_tile = HW  # full extent (tiny lane dim, huge C) — rare
        else:
            max_lanes = max(_LANE,
                            (block_budget // max(1, C * itemsize)) // _LANE * _LANE)
            l_tile = min(max_lanes, (HW // _LANE) * _LANE)

    # Megacore: make sure there are >= 2 grid steps if we can do it cleanly.
    n_b = N // bn
    n_l = pl.cdiv(HW, l_tile)
    if n_b * n_l < 2:
        if bn >= 2:
            bn = bn // 2
            while N % bn != 0:
                bn -= 1
        elif l_tile == HW and HW % (2 * _LANE) == 0:
            l_tile = HW // 2

    return bn, l_tile


def layer_norm(x_nchw, g, b, *, eps=1e-5):
    """LayerNorm over the channel dim of an NCHW tensor.

    x_nchw : (N, C, H, W)
    g, b   : (1, C, 1, 1)
    returns: (N, C, H, W)
    """
    N, C, H, W = x_nchw.shape
    HW = H * W

    # Metadata-only reshapes (tensor already contiguous in NCHW) — no HBM traffic.
    x3 = x_nchw.reshape(N, C, HW)
    g3 = g.reshape(1, C, 1)
    b3 = b.reshape(1, C, 1)

    itemsize = jnp.dtype(x_nchw.dtype).itemsize

    # Gen-gated budgets: v7x has 64 MiB VMEM per TC, v5e/v6e have 128 MiB.
    try:
        vmem_cap = int(pltpu.get_tpu_info().vmem_capacity_bytes)
    except Exception:  # pragma: no cover - conservative fallback
        vmem_cap = 64 * 1024 * 1024
    block_budget = (2 << 20) if vmem_cap <= (64 << 20) else (8 << 20)

    bn, l_tile = _plan_blocks(N, C, HW, itemsize, block_budget)
    n_b = N // bn
    n_l = pl.cdiv(HW, l_tile)

    # VMEM footprint: double-buffered in + out blocks (input dtype) plus the
    # f32 intermediates inside the kernel (x upcast, xc, product, result).
    block_elems = bn * C * l_tile
    footprint = 4 * block_elems * itemsize + 4 * block_elems * 4 + (1 << 20)
    vmem_limit = int(min(vmem_cap * 3 // 4, max(32 << 20, 2 * footprint)))

    kernel = functools.partial(_layernorm_kernel, eps=eps)

    out3 = pl.pallas_call(
        kernel,
        out_shape=jax.ShapeDtypeStruct((N, C, HW), x_nchw.dtype),
        grid=(n_b, n_l),
        in_specs=[
            pl.BlockSpec((bn, C, l_tile), lambda n, l: (n, 0, l)),
            pl.BlockSpec((1, C, 1), lambda n, l: (0, 0, 0)),
            pl.BlockSpec((1, C, 1), lambda n, l: (0, 0, 0)),
        ],
        out_specs=pl.BlockSpec((bn, C, l_tile), lambda n, l: (n, 0, l)),
        compiler_params=pltpu.CompilerParams(
            dimension_semantics=("parallel", "parallel"),
            vmem_limit_bytes=vmem_limit,
        ),
    )(x3, g3, b3)

    return out3.reshape(N, C, H, W)


def _reference(x, g, b, eps):
    """Pure-JAX reference matching the PyTorch forward exactly."""
    mean = jnp.mean(x, axis=1, keepdims=True)
    var = jnp.mean((x - mean) ** 2, axis=1, keepdims=True)  # unbiased=False
    return (x - mean) / (jnp.sqrt(var) + eps) * g + b


if __name__ == "__main__":
    # Shapes consistent with LayerNorm(dim=4) on an NCHW feature map.
    N, C, H, W = 2, 4, 16, 16
    eps = 1e-5

    key = jax.random.PRNGKey(0)
    k_x, k_g, k_b = jax.random.split(key, 3)

    x = jax.random.normal(k_x, (N, C, H, W), jnp.float32)
    g = 1.0 + 0.1 * jax.random.normal(k_g, (1, C, 1, 1), jnp.float32)
    b = 0.1 * jax.random.normal(k_b, (1, C, 1, 1), jnp.float32)

    out = layer_norm(x, g, b, eps=eps)
    out = jax.block_until_ready(out)

    ref = _reference(x, g, b, eps)
    assert out.shape == (N, C, H, W), out.shape
    assert jnp.allclose(out, ref, atol=1e-5, rtol=1e-5), \
        float(jnp.max(jnp.abs(out - ref)))

    print("KERNEL_OK")
</pallas_src>

<mosaic_0001>
module attributes {stable_mosaic.version = 11 : i64} {
  func.func @_layernorm_kernel(%arg0: i32, %arg1: i32, %arg2: memref<1x4x256xf32, #tpu.memory_space<vmem>>, %arg3: memref<1x4x1xf32, #tpu.memory_space<vmem>>, %arg4: memref<1x4x1xf32, #tpu.memory_space<vmem>>, %arg5: memref<1x4x256xf32, #tpu.memory_space<vmem>>) attributes {dimension_semantics = [#tpu.dimension_semantics<parallel>, #tpu.dimension_semantics<parallel>], iteration_bounds = array<i64: 2, 1>, scalar_prefetch = 0 : i64, scratch_operands = 0 : i64, tpu.core_type = #tpu.core_type<tc>, window_params = [{transform_indices = @transform_0, window_bounds = array<i64: 1, 4, 256>}, {pipeline_mode = #tpu.pipeline_mode<synchronous>, transform_indices = @transform_1, window_bounds = array<i64: 1, 4, 1>}, {pipeline_mode = #tpu.pipeline_mode<synchronous>, transform_indices = @transform_2, window_bounds = array<i64: 1, 4, 1>}, {transform_indices = @transform_3, window_bounds = array<i64: 1, 4, 256>}]} {
    %c0 = arith.constant 0 : index
    %c0_0 = arith.constant 0 : index
    %c0_1 = arith.constant 0 : index
    %0 = vector.load %arg2[%c0, %c0_0, %c0_1] : memref<1x4x256xf32, #tpu.memory_space<vmem>>, vector<1x4x256xf32>
    %cst = arith.constant dense<0.000000e+00> : vector<1x256xf32>
    %1 = vector.multi_reduction <add>, %0, %cst [1] : vector<1x4x256xf32> to vector<1x256xf32>
    %2 = vector.shape_cast %1 : vector<1x256xf32> to vector<1x1x256xf32>
    %cst_2 = arith.constant 4.000000e+00 : f32
    %3 = vector.broadcast %cst_2 : f32 to vector<1x1x256xf32>
    %4 = arith.divf %2, %3 : vector<1x1x256xf32>
    %5 = vector.broadcast %4 : vector<1x1x256xf32> to vector<1x4x256xf32>
    %6 = arith.subf %0, %5 : vector<1x4x256xf32>
    %7 = arith.mulf %6, %6 : vector<1x4x256xf32>
    %cst_3 = arith.constant dense<0.000000e+00> : vector<1x256xf32>
    %8 = vector.multi_reduction <add>, %7, %cst_3 [1] : vector<1x4x256xf32> to vector<1x256xf32>
    %9 = vector.shape_cast %8 : vector<1x256xf32> to vector<1x1x256xf32>
    %cst_4 = arith.constant 4.000000e+00 : f32
    %10 = vector.broadcast %cst_4 : f32 to vector<1x1x256xf32>
    %11 = arith.divf %9, %10 : vector<1x1x256xf32>
    %12 = math.sqrt %11 : vector<1x1x256xf32>
    %cst_5 = arith.constant 9.99999974E-6 : f32
    %13 = vector.broadcast %cst_5 : f32 to vector<1x1x256xf32>
    %14 = arith.addf %12, %13 : vector<1x1x256xf32>
    %cst_6 = arith.constant 1.000000e+00 : f32
    %15 = vector.broadcast %cst_6 : f32 to vector<1x1x256xf32>
    %16 = arith.divf %15, %14 : vector<1x1x256xf32>
    %c0_7 = arith.constant 0 : index
    %c0_8 = arith.constant 0 : index
    %c0_9 = arith.constant 0 : index
    %17 = vector.load %arg3[%c0_7, %c0_8, %c0_9] : memref<1x4x1xf32, #tpu.memory_space<vmem>>, vector<1x4x1xf32>
    %c0_10 = arith.constant 0 : index
    %c0_11 = arith.constant 0 : index
    %c0_12 = arith.constant 0 : index
    %18 = vector.load %arg4[%c0_10, %c0_11, %c0_12] : memref<1x4x1xf32, #tpu.memory_space<vmem>>, vector<1x4x1xf32>
    %19 = vector.broadcast %16 : vector<1x1x256xf32> to vector<1x4x256xf32>
    %20 = arith.mulf %6, %19 : vector<1x4x256xf32>
    %21 = vector.broadcast %17 : vector<1x4x1xf32> to vector<1x4x256xf32>
    %22 = arith.mulf %20, %21 : vector<1x4x256xf32>
    %23 = vector.broadcast %18 : vector<1x4x1xf32> to vector<1x4x256xf32>
    %24 = arith.addf %22, %23 : vector<1x4x256xf32>
    %c0_13 = arith.constant 0 : index
    %c0_14 = arith.constant 0 : index
    %c0_15 = arith.constant 0 : index
    %25 = vector.load %arg5[%c0_13, %c0_14, %c0_15] : memref<1x4x256xf32, #tpu.memory_space<vmem>>, vector<1x4x256xf32>
    tpu.vector_store %arg5[%c0_13, %c0_14, %c0_15], %24 {strides = array<i32>} : memref<1x4x256xf32, #tpu.memory_space<vmem>>, vector<1x4x256xf32>,
    return
  }
  func.func @transform_0(%arg0: i32, %arg1: i32) -> (i32, i32, i32) {
    %c0_i32 = arith.constant 0 : i32
    %c0_i32_0 = arith.constant 0 : i32
    return %arg0, %c0_i32, %arg1 : i32, i32, i32
  }
  func.func @transform_1(%arg0: i32, %arg1: i32) -> (i32, i32, i32) {
    %c0_i32 = arith.constant 0 : i32
    %c0_i32_0 = arith.constant 0 : i32
    %c0_i32_1 = arith.constant 0 : i32
    %c0_i32_2 = arith.constant 0 : i32
    return %c0_i32, %c0_i32_0, %c0_i32_1 : i32, i32, i32
  }
  func.func @transform_2(%arg0: i32, %arg1: i32) -> (i32, i32, i32) {
    %c0_i32 = arith.constant 0 : i32
    %c0_i32_0 = arith.constant 0 : i32
    %c0_i32_1 = arith.constant 0 : i32
    %c0_i32_2 = arith.constant 0 : i32
    return %c0_i32, %c0_i32_0, %c0_i32_1 : i32, i32, i32
  }
  func.func @transform_3(%arg0: i32, %arg1: i32) -> (i32, i32, i32) {
    %c0_i32 = arith.constant 0 : i32
    %c0_i32_0 = arith.constant 0 : i32
    return %arg0, %c0_i32, %arg1 : i32, i32, i32
  }
}

</mosaic_0001>

<llo_original>
// kernel: tpu_custom_call.1
$region0: #{tpu_custom_call.1}
  #allocation0 [shape = 'u32[]', space=smem, size = 0x4, offset = 0x4, fixed_abs, tag = 'smem constant byte address 0x4 - core index']
  #allocation1 [shape = 'u32[72,128]{1,0:T(1,128)}', space=vmem, size = 0x9000, scoped, tag = 'internal scratch']
  %s0 = inlined_call_operand.hbm [shape: f32[2,4,256], index: 0, kind: input, shape index: {}]
  %s1 = inlined_call_operand.vmem [shape: f32[1,4,1], index: 1, kind: input, shape index: {}]
  %s2 = inlined_call_operand.vmem [shape: f32[1,4,1], index: 2, kind: input, shape index: {}]
  %s3 = inlined_call_operand.hbm [shape: f32[2,4,256], index: 3, kind: output, shape index: {}]
  %s4 = sld [smem:[#allocation0]]
  $region49: #{tpu_custom_call.1} parent=0
    _
  %s6 = ssub.s32 1, %s4
  %s7 = scalar_select 0, %s6, %s4
  $region1: #{tpu_custom_call.1} parent=0
    #allocation2 [shape = 'u8[8192]{0}', space=vmem, size = 0x2000, scoped, tag = 'input window, operand 0']
    #allocation3 [shape = 's32[2]{0}', space=sflag, size = 0x8, scoped, tag = 'scoped memory for tpu_custom_call.1']
    #allocation4 [shape = 's32[2]{0}', space=sflag, size = 0x8, scoped, tag = 'scoped memory for tpu_custom_call.1']
    #allocation5 [shape = 'u8[8192]{0}', space=vmem, size = 0x2000, scoped, tag = 'output window, operand 0']
    %8 = vsyncpa [#allocation3], 0
    %s9 = scalar_lea.sflag [#allocation3], 1
    %10 = vsyncpa %s9, 0
    %11 = vsyncpa [#allocation4], 0
    %s12 = scalar_lea.sflag [#allocation4], 1
    %13 = vsyncpa %s12, 0
    loop: start=0, step=1, limit=4
    $region2: #{tpu_custom_call.1} parent=1 // loop_pre_header
      _
    $region3: #{tpu_custom_call.1} parent=1 // loop_header
      %s15 = sphi 0, %s19
      %p16 = scmp.ge.s32.totalorder %s15, 4
      %s22 = sphi 0, %s34
      %s23 = sphi 0, %s30
      %s24 = sphi 0, %s22
      %s25 = sphi 0, %s23
      %s26 = sphi 0, %s24
      %s27 = sphi 0, %s25
      %s39 = sphi 0, %s41
      %s42 = sphi 0, %s39
      %s43 = sphi 0, %s42
      %s59 = sphi 0, %s43
      %s63 = sphi 0, %s63
      %s65 = sphi 0, %s63
      %s66 = sphi 0, %s65
      %s80 = sphi 0, %s66
      %s84 = sphi 0, %s84
      %s86 = sphi 0, %s84
      %s87 = sphi 0, %s86
      %s101 = sphi 0, %s87
      %s109 = sphi 0, %s111
      %s112 = sphi 0, %s109
      %s113 = sphi 0, %s112
      %s129 = sphi 0, %s113
    $region4: #{tpu_custom_call.1} parent=1 // loop_header_branch
      %18 = sbr.rel (%p16) target = $region8
    $region5: #{tpu_custom_call.1} parent=1 // loop_body
      %s20 = ssub.s32 %s15, 1
      %s21 = ssub.s32 %s15, 2
      %s28 = sadd.s32 1, %s23
      %p29 = scmp.ge.s32.totalorder %s28, 1
      %s30 = scalar_select %p29, 0, %s28
      %s31 = sadd.s32 1, %s22
      %s32 = scalar_select %p29, %s31, %s22
      %p33 = scmp.ge.s32.totalorder %s32, 2
      %s34 = scalar_select %p33, 0, %s32
      %s35 = ssub.s32 %s22, %s34
      %s36 = ssub.s32 %s23, %s30
      %s37 = sor.u32 %s35, %s36
      %p38 = scmp.eq.s32.totalorder %s37, 0
      %s40 = sadd.s32 %s39, 1
      %s41 = scalar_select %p38, %s39, %s40
      %p44 = pneg %p38
      %p45 = scmp.eq.s32.totalorder %s15, 1
      %p46 = por %p44, %p45
      %p47 = scmp.ne.s32.totalorder %s39, %s42
      %p48 = scmp.eq.s32.totalorder %s15, 0
      %p49 = por %p47, %p48
      %p50 = scmp.ne.s32.totalorder %s39, %s42
      %p51 = scmp.eq.s32.totalorder %s20, 1
      %p52 = por %p50, %p51
      %p53 = scmp.ne.s32.totalorder %s42, %s43
      %p54 = scmp.eq.s32.totalorder %s20, 0
      %p55 = por %p53, %p54
      %p56 = scmp.ne.s32.totalorder %s42, %s43
      %p57 = scmp.eq.s32.totalorder %s21, 1
      %p58 = por %p56, %p57
      %p60 = scmp.ne.s32.totalorder %s43, %s59
      %p61 = scmp.eq.s32.totalorder %s21, 0
      %p62 = por %p60, %p61
      %s64 = sadd.s32 %s63, 1
      %p67 = scmp.eq.s32.totalorder %s15, 1
      %p68 = scmp.ne.s32.totalorder %s63, %s65
      %p69 = scmp.eq.s32.totalorder %s15, 0
      %p70 = por %p68, %p69
      %p71 = scmp.ne.s32.totalorder %s63, %s65
      %p72 = scmp.eq.s32.totalorder %s20, 1
      %p73 = por %p71, %p72
      %p74 = scmp.ne.s32.totalorder %s65, %s66
      %p75 = scmp.eq.s32.totalorder %s20, 0
      %p76 = por %p74, %p75
      %p77 = scmp.ne.s32.totalorder %s65, %s66
      %p78 = scmp.eq.s32.totalorder %s21, 1
      %p79 = por %p77, %p78
      %p81 = scmp.ne.s32.totalorder %s66, %s80
      %p82 = scmp.eq.s32.totalorder %s21, 0
      %p83 = por %p81, %p82
      %s85 = sadd.s32 %s84, 1
      %p88 = scmp.eq.s32.totalorder %s15, 1
      %p89 = scmp.ne.s32.totalorder %s84, %s86
      %p90 = scmp.eq.s32.totalorder %s15, 0
      %p91 = por %p89, %p90
      %p92 = scmp.ne.s32.totalorder %s84, %s86
      %p93 = scmp.eq.s32.totalorder %s20, 1
      %p94 = por %p92, %p93
      %p95 = scmp.ne.s32.totalorder %s86, %s87
      %p96 = scmp.eq.s32.totalorder %s20, 0
      %p97 = por %p95, %p96
      %p98 = scmp.ne.s32.totalorder %s86, %s87
      %p99 = scmp.eq.s32.totalorder %s21, 1
      %p100 = por %p98, %p99
      %p102 = scmp.ne.s32.totalorder %s87, %s101
      %p103 = scmp.eq.s32.totalorder %s21, 0
      %p104 = por %p102, %p103
      %s105 = ssub.s32 %s22, %s34
      %s106 = ssub.s32 %s23, %s30
      %s107 = sor.u32 %s105, %s106
      %p108 = scmp.eq.s32.totalorder %s107, 0
      %s110 = sadd.s32 %s109, 1
      %s111 = scalar_select %p108, %s109, %s110
      %p114 = pneg %p108
      %p115 = scmp.eq.s32.totalorder %s15, 1
      %p116 = por %p114, %p115
      %p117 = scmp.ne.s32.totalorder %s109, %s112
      %p118 = scmp.eq.s32.totalorder %s15, 0
      %p119 = por %p117, %p118
      %p120 = scmp.ne.s32.totalorder %s109, %s112
      %p121 = scmp.eq.s32.totalorder %s20, 1
      %p122 = por %p120, %p121
      %p123 = scmp.ne.s32.totalorder %s112, %s113
      %p124 = scmp.eq.s32.totalorder %s20, 0
      %p125 = por %p123, %p124
      %p126 = scmp.ne.s32.totalorder %s112, %s113
      %p127 = scmp.eq.s32.totalorder %s21, 1
      %p128 = por %p126, %p127
      %p130 = scmp.ne.s32.totalorder %s113, %s129
      %p131 = scmp.eq.s32.totalorder %s21, 0
      %p132 = por %p130, %p131
      %p133 = scmp.le.s32.totalorder 1, %s15
      %p134 = scmp.lt.s32.totalorder %s15, 3
      %p135 = pnand %p133, %p134
      %p136 = pneg %p135
      // Predicated region
      $region9: #{tpu_custom_call.1} parent=5 // pred_check
        _
      $region10: #{tpu_custom_call.1} parent=5 // pred_check_branch
        %138 = sbr.rel (%p135) target = $region12
      $region11: #{tpu_custom_call.1} parent=5 // pred_region
        %s139 = ssub.s32 %s15, 1
        // Predicated region
        $region13: #{tpu_custom_call.1} parent=11 // pred_check
          %p140 = pneg %p76
        $region14: #{tpu_custom_call.1} parent=11 // pred_check_branch
          %142 = sbr.rel (%p140) target = $region16
        $region15: #{tpu_custom_call.1} parent=11 // pred_region
          _
        $region16: #{tpu_custom_call.1} parent=11 // pred_fallthru
          _
        // Predicated region
        $region17: #{tpu_custom_call.1} parent=11 // pred_check
          %p143 = pneg %p97
        $region18: #{tpu_custom_call.1} parent=11 // pred_check_branch
          %145 = sbr.rel (%p143) target = $region20
        $region19: #{tpu_custom_call.1} parent=11 // pred_region
          _
        $region20: #{tpu_custom_call.1} parent=11 // pred_fallthru
          _
      $region12: #{tpu_custom_call.1} parent=5 // pred_fallthru
        _
      %p146 = scmp.lt.s32.totalorder %s15, 2
      // Predicated region
      $region21: #{tpu_custom_call.1} parent=5 // pred_check
        %p147 = pneg %p146
      $region22: #{tpu_custom_call.1} parent=5 // pred_check_branch
        %149 = sbr.rel (%p147) target = $region24
      $region23: #{tpu_custom_call.1} parent=5 // pred_region
        // Predicated region
        $region25: #{tpu_custom_call.1} parent=23 // pred_check
          %p150 = pneg %p49
        $region26: #{tpu_custom_call.1} parent=23 // pred_check_branch
          %152 = sbr.rel (%p150) target = $region28
        $region27: #{tpu_custom_call.1} parent=23 // pred_region
          %s153 = sand.u32 %s39, 1
          %s154 = scalar_lea.sflag [#allocation3], %s153
          %s155 = sand.u32 %s39, 1
          %s156 = smul.addr %s155, 8
          %s157 = scalar_lea.vmem [#allocation2], %s156
          %s158 = smul.u32 2, %s23
          %160 = vsyncadd %s154, 0
          %s161 = smul.addr %s22, 2
          %s162 = sadd.s32 %s158, %s161
          %s163 = smul.addr %s162, 4
          %s164 = scalar_lea.hbm %s0, %s163
          %s166 = sshll.u32 %s164, 4
          %s167 = int_to_ptr.hbm [resolvable:$true] %s166
          %s168 = sshll.u32 %s157, 4
          %s169 = int_to_ptr.vmem [resolvable:$true] %s168
          %171 = dma.hbm_to_vmem [thread:$0]  %s167, 128, %s169, %s154
        $region28: #{tpu_custom_call.1} parent=23 // pred_fallthru
          _
      $region24: #{tpu_custom_call.1} parent=5 // pred_fallthru
        _
      %p172 = scmp.le.s32.totalorder 1, %s15
      %p173 = scmp.lt.s32.totalorder %s15, 3
      %p174 = pnand %p172, %p173
      %p175 = pneg %p174
      // Predicated region
      $region29: #{tpu_custom_call.1} parent=5 // pred_check
        _
      $region30: #{tpu_custom_call.1} parent=5 // pred_check_branch
        %177 = sbr.rel (%p174) target = $region32
      $region31: #{tpu_custom_call.1} parent=5 // pred_region
        %s178 = ssub.s32 %s15, 1
        %s179 = sand.u32 %s42, 1
        %s180 = scalar_lea.sflag [#allocation3], %s179
        %s181 = sand.u32 %s42, 1
        %s182 = smul.addr %s181, 8
        %s183 = scalar_lea.vmem [#allocation2], %s182
        // Predicated region
        $region33: #{tpu_custom_call.1} parent=31 // pred_check
          %p184 = pneg %p55
        $region34: #{tpu_custom_call.1} parent=31 // pred_check_branch
          %186 = sbr.rel (%p184) target = $region36
        $region35: #{tpu_custom_call.1} parent=31 // pred_region
          %188 = dma.done %s180, 128
        $region36: #{tpu_custom_call.1} parent=31 // pred_fallthru
          _
        %s189 = sand.u32 %s42, 1
        %s190 = scalar_lea.sflag [#allocation3], %s189
        %s191 = sand.u32 %s42, 1
        %s192 = smul.addr %s191, 8
        %s193 = scalar_lea.vmem [#allocation2], %s192
        %p194 = pneg %p55
        %p195 = pneg %p52
        %p196 = pneg %p76
        %p197 = pneg %p73
        %p198 = pneg %p97
        %p199 = pneg %p94
        %p200 = pneg %p125
        %p201 = pneg %p122
        %s202 = sand.u32 %s112, 1
        %s203 = scalar_lea.sflag [#allocation4], %s202
        %s204 = sand.u32 %s112, 1
        %s205 = smul.addr %s204, 8
        %s206 = scalar_lea.vmem [#allocation5], %s205
        %s207 = smul.u32 2, %s25
        %s208 = smul.u32 2, %s25
        %v209 = vld [vmem:[%s183] sm:$0xff]
        %211 = vst [vmem:[#allocation1] ss:$2 sm:$0xff] %v209
        %v212 = vld.sshfl [vmem:[#allocation1] sm:$0xff pattern:$0x75316420]
        %v213 = vld.sshfl [vmem:[#allocation1 + $0x8] sm:$0xff pattern:$0x75316420]
        %vm216 = vcmask 1043456
        %v217 = vsel %vm216, %v212, 0.0
        %v218 = vrot.slane %v217, 4
        %v219 = vadd.f32 %v217, %v218
        %v220 = vrot.slane %v219, 2
        %v221 = vadd.f32 %v219, %v220
        %v222 = vrot.slane %v221, 1
        %v223 = vadd.f32 %v221, %v222
        %v224 = vsel %vm216, %v213, 0.0
        %v225 = vrot.slane %v224, 4
        %v226 = vadd.f32 %v224, %v225
        %v227 = vrot.slane %v226, 2
        %v228 = vadd.f32 %v226, %v227
        %v229 = vrot.slane %v228, 1
        %v230 = vadd.f32 %v228, %v229
        %v231 = vrcp.pop 4.0
        %v232 = vmul.f32 4.0, %v231
        %v233 = vsub.f32 1.0, %v232
        %v234 = vmul.f32 %v231, %v233
        %v235 = vadd.f32 %v231, %v234
        %vm236 = vweird.f32 %v231
        %v237 = vsel %vm236, %v231, %v235
        %v238 = vmul.f32 %v223, %v237
        %v239 = vmul.f32 %v230, %v237
        %v242 = vrot.slane %v239, 4
        %v243 = vsel %vm216, %v238, %v242
        %v245 = vsub.f32 %v209, %v243
        %v246 = vmul.f32 %v245, %v245
        %248 = vst [vmem:[#allocation1] ss:$2 sm:$0xff] %v246
        %v249 = vld.sshfl [vmem:[#allocation1] sm:$0xff pattern:$0x75316420]
        %v250 = vld.sshfl [vmem:[#allocation1 + $0x8] sm:$0xff pattern:$0x75316420]
        %v253 = vsel %vm216, %v249, 0.0
        %v254 = vrot.slane %v253, 4
        %v255 = vadd.f32 %v253, %v254
        %v256 = vrot.slane %v255, 2
        %v257 = vadd.f32 %v255, %v256
        %v258 = vrot.slane %v257, 1
        %v259 = vadd.f32 %v257, %v258
        %v260 = vsel %vm216, %v250, 0.0
        %v261 = vrot.slane %v260, 4
        %v262 = vadd.f32 %v260, %v261
        %v263 = vrot.slane %v262, 2
        %v264 = vadd.f32 %v262, %v263
        %v265 = vrot.slane %v264, 1
        %v266 = vadd.f32 %v264, %v265
        %v267 = vmul.f32 %v259, %v237
        %v268 = vmul.f32 %v266, %v237
        %v269 = vrsqrt.pop %v267
        %v270 = vmul.f32 %v269, %v267
        %v271 = vmul.f32 %v270, %v269
        %v272 = vmul.f32 0.5, %v271
        %v273 = vsub.f32 1.5, %v272
        %v274 = vmul.f32 %v269, %v273
        %v275 = vmul.f32 %v267, %v274
        %vm276 = vcmp.eq.f32.partialorder %v267, inf
        %v277 = vsel %vm276, %v267, %v275
        %vm278 = vcmp.eq.f32.partialorder %v267, 0.0
        %v279 = vand.u32 %v267, 2147483648
        %v280 = vsel %vm278, %v279, %v277
        %v281 = vrsqrt.pop %v268
        %v282 = vmul.f32 %v281, %v268
        %v283 = vmul.f32 %v282, %v281
        %v284 = vmul.f32 0.5, %v283
        %v285 = vsub.f32 1.5, %v284
        %v286 = vmul.f32 %v281, %v285
        %v287 = vmul.f32 %v268, %v286
        %vm288 = vcmp.eq.f32.partialorder %v268, inf
        %v289 = vsel %vm288, %v268, %v287
        %vm290 = vcmp.eq.f32.partialorder %v268, 0.0
        %v291 = vand.u32 %v268, 2147483648
        %v292 = vsel %vm290, %v291, %v289
        %v293 = vadd.f32 %v280, 1e-05
        %v294 = vadd.f32 %v292, 1e-05
        %v295 = vrcp.pop %v293
        %v296 = vmul.f32 %v293, %v295
        %v297 = vsub.f32 1.0, %v296
        %v298 = vmul.f32 %v295, %v297
        %v299 = vadd.f32 %v295, %v298
        %vm300 = vweird.f32 %v293
        %vm301 = vweird.f32 %v295
        %vm302 = vmor %vm300, %vm301
        %v303 = vsel %vm302, %v295, %v299
        %v304 = vand.u32 2147483647, %v293
        %vm305 = vcmp.eq.f32.partialorder %v304, 8.507059e+37
        %v306 = vand.u32 %v293, 2147483648
        %v307 = vor.u32 1.1754944e-38, %v306
        %v308 = vsel %vm305, %v307, %v303
        %v309 = vmul.f32 1.0, %v308
        %v310 = vrcp.pop %v294
        %v311 = vmul.f32 %v294, %v310
        %v312 = vsub.f32 1.0, %v311
        %v313 = vmul.f32 %v310, %v312
        %v314 = vadd.f32 %v310, %v313
        %vm315 = vweird.f32 %v294
        %vm316 = vweird.f32 %v310
        %vm317 = vmor %vm315, %vm316
        %v318 = vsel %vm317, %v310, %v314
        %v319 = vand.u32 2147483647, %v294
        %vm320 = vcmp.eq.f32.partialorder %v319, 8.507059e+37
        %v321 = vand.u32 %v294, 2147483648
        %v322 = vor.u32 1.1754944e-38, %v321
        %v323 = vsel %vm320, %v322, %v318
        %v324 = vmul.f32 1.0, %v323
        %v325 = vld [vmem:[%s1] sm:$0xf]
        %v326 = vld [vmem:[%s2] sm:$0xf]
        %v329 = vrot.slane %v324, 4
        %v330 = vsel %vm216, %v309, %v329
        %v332 = vmul.f32 %v245, %v330
        %334 = vset.pattern.permute.xlu0 0
        %335 = vperm.xlu0 %334, %v325
        %v336 = vpop.permute.xlu0 %335
        %v338 = vunpack.c.l.s4 839922192
        %v339 = vunpack.c.0.s8 %v338
        %v340 = vperm.slane %v336, %v339
        %v342 = vmul.f32 %v332, %v340
        %344 = vset.pattern.permute.xlu0 0
        %345 = vperm.xlu0 %344, %v326
        %v346 = vpop.permute.xlu0 %345
        %v348 = vunpack.c.l.s4 839922192
        %v349 = vunpack.c.0.s8 %v348
        %v350 = vperm.slane %v346, %v349
        %v352 = vadd.f32 %v342, %v350
        %353 = vst [vmem:[%s206] sm:$0xff] %v352
        %s354 = sand.u32 %s112, 1
        %s355 = scalar_lea.sflag [#allocation4], %s354
        %s356 = sand.u32 %s112, 1
        %s357 = smul.addr %s356, 8
        %s358 = scalar_lea.vmem [#allocation5], %s357
        // Predicated region
        $region37: #{tpu_custom_call.1} parent=31 // pred_check
          %p359 = pneg %p122
        $region38: #{tpu_custom_call.1} parent=31 // pred_check_branch
          %361 = sbr.rel (%p359) target = $region40
        $region39: #{tpu_custom_call.1} parent=31 // pred_region
          %s362 = smul.u32 2, %s25
          %364 = vsyncadd %s355, 0
          %s365 = smul.addr %s24, 2
          %s366 = sadd.s32 %s362, %s365
          %s367 = smul.addr %s366, 4
          %s368 = scalar_lea.hbm %s3, %s367
          %s370 = sshll.u32 %s358, 4
          %s371 = int_to_ptr.vmem [resolvable:$true] %s370
          %s372 = sshll.u32 %s368, 4
          %s373 = int_to_ptr.hbm [resolvable:$true] %s372
          %375 = dma.vmem_to_hbm [thread:$0]  %s371, 128, %s373, %s355
        $region40: #{tpu_custom_call.1} parent=31 // pred_fallthru
          _
      $region32: #{tpu_custom_call.1} parent=5 // pred_fallthru
        _
      %p376 = scmp.le.s32.totalorder 2, %s15
      // Predicated region
      $region41: #{tpu_custom_call.1} parent=5 // pred_check
        %p377 = pneg %p376
      $region42: #{tpu_custom_call.1} parent=5 // pred_check_branch
        %379 = sbr.rel (%p377) target = $region44
      $region43: #{tpu_custom_call.1} parent=5 // pred_region
        %s380 = ssub.s32 %s15, 2
        // Predicated region
        $region45: #{tpu_custom_call.1} parent=43 // pred_check
          %p381 = pneg %p128
        $region46: #{tpu_custom_call.1} parent=43 // pred_check_branch
          %383 = sbr.rel (%p381) target = $region48
        $region47: #{tpu_custom_call.1} parent=43 // pred_region
          %s384 = sand.u32 %s113, 1
          %s385 = scalar_lea.sflag [#allocation4], %s384
          %s386 = sand.u32 %s113, 1
          %s387 = smul.addr %s386, 8
          %s388 = scalar_lea.vmem [#allocation5], %s387
          %390 = dma.done %s385, 128
        $region48: #{tpu_custom_call.1} parent=43 // pred_fallthru
          _
      $region44: #{tpu_custom_call.1} parent=5 // pred_fallthru
        _
    $region6: #{tpu_custom_call.1} parent=1 // loop_footer
      %s19 = sadd.s32 1, %s15
    $region7: #{tpu_custom_call.1} parent=1 // loop_footer_branch
      %14 = sbr.rel target = $region3
    $region8: #{tpu_custom_call.1} parent=1 // loop_exit
      _
    %391 = vsyncpa [#allocation3], 1
    %s392 = scalar_lea.sflag [#allocation3], 1
    %393 = vsyncpa %s392, 1
    %394 = vsyncpa [#allocation4], 1
    %s395 = scalar_lea.sflag [#allocation4], 1
    %396 = vsyncpa %s395, 1

</llo_original>
